<compile_context>
chip_gen: v7x
topology: tpu7x:2x2x1
jax: 0.10.0
libtpu: 0.0.40
codegen_flags: <defaults>
</compile_context>

<pallas_src>
import functools

import jax
import jax.numpy as jnp
from jax import lax
from jax.experimental import pallas as pl
from jax.experimental.pallas import tpu as pltpu


def _round_up(x: int, m: int) -> int:
    return ((x + m - 1) // m) * m


def _sublane_min(dtype) -> int:
    # f32 -> 8, bf16 -> 16, int8/fp8 -> 32 (packed sublane minimum).
    return {4: 8, 2: 16, 1: 32}.get(jnp.dtype(dtype).itemsize, 8)


def _vmem_capacity_bytes() -> int:
    try:
        return int(pltpu.get_tpu_info().vmem_capacity_bytes)
    except Exception:
        return 64 << 20  # conservative: v7x per-TensorCore VMEM


def _separation_loss_ref(protos: jax.Array) -> jax.Array:
    p = protos.astype(jnp.float32)
    n = p.shape[0]
    m = p @ p.T - 2.0 * jnp.eye(n, dtype=jnp.float32)
    return jnp.mean(jnp.max(m, axis=1))


# ----------------------------------------------------------------------------
# Kernels
# ----------------------------------------------------------------------------
def _sep_loss_kernel_resident(lhs_ref, rhs_ref, o_ref, *, n_real, tm, n_cols):
    """1-D grid: one row tile against the full VMEM-resident prototype matrix."""
    i = pl.program_id(0)
    # Contract the D axis of both operands directly (no RHS transpose).
    m = lax.dot_general(lhs_ref[...], rhs_ref[...],
                        dimension_numbers=(((1,), (1,)), ((), ())),
                        preferred_element_type=jnp.float32)        # (tm, n_cols)
    row = i * tm + lax.broadcasted_iota(jnp.int32, (tm, 1), 0)
    col = lax.broadcasted_iota(jnp.int32, (1, n_cols), 1)
    m = jnp.where(row == col, m - 2.0, m)                          # fused "- 2*I"
    if n_cols != n_real:   # static: only emitted when column padding exists
        m = jnp.where(col < n_real, m, -jnp.inf)
    o_ref[...] = jnp.max(m, axis=1, keepdims=True)                 # (tm, 1)


def _sep_loss_kernel_tiled(lhs_ref, rhs_ref, o_ref, *, n_real, n_pad, tm, tn):
    """2-D grid: running row-max accumulated directly in the output block."""
    i = pl.program_id(0)
    j = pl.program_id(1)

    @pl.when(j == 0)
    def _init():
        o_ref[...] = jnp.full((tm, 1), -jnp.inf, dtype=jnp.float32)

    m = lax.dot_general(lhs_ref[...], rhs_ref[...],
                        dimension_numbers=(((1,), (1,)), ((), ())),
                        preferred_element_type=jnp.float32)        # (tm, tn)
    row = i * tm + lax.broadcasted_iota(jnp.int32, (tm, 1), 0)
    col = j * tn + lax.broadcasted_iota(jnp.int32, (1, tn), 1)
    m = jnp.where(row == col, m - 2.0, m)
    if n_pad != n_real:
        m = jnp.where(col < n_real, m, -jnp.inf)
    o_ref[...] = jnp.maximum(o_ref[...], jnp.max(m, axis=1, keepdims=True))


# ----------------------------------------------------------------------------
# Wrapper
# ----------------------------------------------------------------------------
def separation_loss(protos: jax.Array, *, max_tile: int = 512,
                    allow_jnp_fallback: bool = True,
                    force_tiled: bool = False) -> jax.Array:
    """Pallas implementation of SeparationLoss.forward. protos: (N, D)."""
    n, d = protos.shape

    if allow_jnp_fallback and n <= 64 and not force_tiled:
        # One-vreg problem: Pallas launch/pipeline overhead dominates.
        return _separation_loss_ref(protos)

    itemsize = jnp.dtype(protos.dtype).itemsize
    sub = _sublane_min(protos.dtype)
    # Row/col tile: sublane-aligned; default max_tile=512 keeps tiles a
    # multiple of 256 for large N (full v6e/v7x MXU).
    tm = max(sub, (min(max_tile, _round_up(n, sub)) // sub) * sub)
    n_pad = _round_up(n, tm)
    if n_pad != n:
        protos = jnp.pad(protos, ((0, n_pad - n), (0, 0)))

    vmem_cap = _vmem_capacity_bytes()
    lhs_tile_bytes = tm * d * itemsize
    rhs_all_bytes = n_pad * d * itemsize
    # Resident-RHS budget: 2x buffers for both operands + f32 (tm, n_pad)
    # intermediate + slack; gated on this chip's VMEM (v7x: 64 MiB physical).
    resident_need = (2 * rhs_all_bytes + 2 * lhs_tile_bytes
                     + tm * n_pad * 4 + (2 << 20))
    use_resident = (not force_tiled) and resident_need <= int(0.45 * vmem_cap)

    n_row_tiles = n_pad // tm
    out_shape = jax.ShapeDtypeStruct((n_pad, 1), jnp.float32)

    if use_resident:
        kernel = functools.partial(_sep_loss_kernel_resident,
                                   n_real=n, tm=tm, n_cols=n_pad)
        grid = (n_row_tiles,)
        in_specs = [
            pl.BlockSpec((tm, d), lambda i: (i, 0)),      # row tile of P
            pl.BlockSpec((n_pad, d), lambda i: (0, 0)),   # whole P, VMEM-resident
        ]
        out_specs = pl.BlockSpec((tm, 1), lambda i: (i, 0))
        semantics = ("parallel",)
        bytes_accessed = 2 * rhs_all_bytes + n_pad * 4
        vmem_need = resident_need
    else:
        tn = tm
        kernel = functools.partial(_sep_loss_kernel_tiled,
                                   n_real=n, n_pad=n_pad, tm=tm, tn=tn)
        grid = (n_row_tiles, n_pad // tn)
        in_specs = [
            pl.BlockSpec((tm, d), lambda i, j: (i, 0)),   # row tile of P
            pl.BlockSpec((tn, d), lambda i, j: (j, 0)),   # col tile of P (streamed)
        ]
        out_specs = pl.BlockSpec((tm, 1), lambda i, j: (i, 0))
        semantics = ("parallel", "arbitrary")
        # RHS is re-streamed once per row tile.
        bytes_accessed = rhs_all_bytes * (1 + n_row_tiles) + n_pad * 4
        vmem_need = 4 * lhs_tile_bytes + tm * tn * 4 + (2 << 20)

    vmem_limit = int(min(0.9 * vmem_cap, max(vmem_need + (4 << 20), 32 << 20)))

    rmax = pl.pallas_call(
        kernel,
        out_shape=out_shape,
        grid_spec=pltpu.PrefetchScalarGridSpec(
            num_scalar_prefetch=0,
            grid=grid,
            in_specs=in_specs,
            out_specs=out_specs),
        compiler_params=pltpu.CompilerParams(
            dimension_semantics=semantics,
            vmem_limit_bytes=vmem_limit),
        cost_estimate=pl.CostEstimate(
            flops=2 * n_pad * n_pad * d,
            transcendentals=0,
            bytes_accessed=int(bytes_accessed)),
    )(protos, protos)

    # Final mean over the real rows (padded rows are simply sliced away).
    return jnp.mean(rmax[:n, 0])


# ----------------------------------------------------------------------------
# Self-test
# ----------------------------------------------------------------------------
if __name__ == "__main__":
    key = jax.random.PRNGKey(0)
    k1, k2, k3 = jax.random.split(key, 3)

    # Case 1: shipped tiny case (N=8 prototypes, D=32), kernel forced
    # (resident path, grid (1,)).
    p1 = jax.random.normal(k1, (8, 32), dtype=jnp.float32)
    p1 = p1 / jnp.linalg.norm(p1, axis=1, keepdims=True)
    got1 = jax.block_until_ready(separation_loss(p1, allow_jnp_fallback=False))
    ref1 = jax.block_until_ready(_separation_loss_ref(p1))
    assert jnp.allclose(got1, ref1, atol=5e-3, rtol=5e-3), (got1, ref1)

    # Case 2: multi-tile 2-D streamed path with row/col padding
    # (N=40, tile 16 -> n_pad=48, grid (3,3)).
    p2 = jax.random.normal(k2, (40, 32), dtype=jnp.float32)
    p2 = p2 / jnp.linalg.norm(p2, axis=1, keepdims=True)
    got2 = jax.block_until_ready(
        separation_loss(p2, max_tile=16, allow_jnp_fallback=False,
                        force_tiled=True))
    ref2 = jax.block_until_ready(_separation_loss_ref(p2))
    assert jnp.allclose(got2, ref2, atol=5e-3, rtol=5e-3), (got2, ref2)

    # Case 3: bf16 inputs (16-sublane tile minimum), resident path with padding
    # (N=24 -> n_pad=32).
    p3 = jax.random.normal(k3, (24, 64), dtype=jnp.float32)
    p3 = (p3 / jnp.linalg.norm(p3, axis=1, keepdims=True)).astype(jnp.bfloat16)
    got3 = jax.block_until_ready(separation_loss(p3, allow_jnp_fallback=False))
    ref3 = jax.block_until_ready(_separation_loss_ref(p3))
    assert jnp.allclose(got3, ref3, atol=2e-2, rtol=2e-2), (got3, ref3)

    # Case 4: tiny-case jnp bypass agrees with the reference.
    got4 = jax.block_until_ready(separation_loss(p1))
    assert jnp.allclose(got4, ref1, atol=5e-3, rtol=5e-3), (got4, ref1)

    print("KERNEL_OK")
</pallas_src>

<mosaic_0001>
module attributes {stable_mosaic.version = 11 : i64} {
  func.func @_sep_loss_kernel_resident(%arg0: i32, %arg1: memref<8x32xf32, #tpu.memory_space<vmem>>, %arg2: memref<8x32xf32, #tpu.memory_space<vmem>>, %arg3: memref<8x1xf32, #tpu.memory_space<vmem>>) attributes {dimension_semantics = [#tpu.dimension_semantics<parallel>], iteration_bounds = array<i64: 1>, scalar_prefetch = 0 : i64, scratch_operands = 0 : i64, tpu.core_type = #tpu.core_type<tc>, window_params = [{transform_indices = @transform_0, window_bounds = array<i64: 8, 32>}, {pipeline_mode = #tpu.pipeline_mode<synchronous>, transform_indices = @transform_1, window_bounds = array<i64: 8, 32>}, {transform_indices = @transform_2, window_bounds = array<i64: 8, 1>}]} {
    %c0 = arith.constant 0 : index
    %c0_0 = arith.constant 0 : index
    %0 = vector.load %arg1[%c0, %c0_0] : memref<8x32xf32, #tpu.memory_space<vmem>>, vector<8x32xf32>
    %c0_1 = arith.constant 0 : index
    %c0_2 = arith.constant 0 : index
    %1 = vector.load %arg2[%c0_1, %c0_2] : memref<8x32xf32, #tpu.memory_space<vmem>>, vector<8x32xf32>
    %cst = arith.constant dense<0.000000e+00> : vector<8x8xf32>
    %2 = tpu.matmul %0, %1, %cst {dimension_numbers = #tpu.dot_dimension_numbers<[1], [1], [0], [0], [0, 0, 1, 0], [], []>} : vector<8x32xf32>, vector<8x32xf32>, vector<8x8xf32> -> vector<8x8xf32>
    %c8_i32 = arith.constant 8 : i32
    %3 = arith.muli %arg0, %c8_i32 : i32
    %4 = tpu.iota {dimensions = array<i32: 0>} : vector<8x1xi32>
    %5 = vector.broadcast %3 : i32 to vector<8x1xi32>
    %6 = arith.addi %5, %4 : vector<8x1xi32>
    %7 = tpu.iota {dimensions = array<i32: 1>} : vector<1x8xi32>
    %8 = vector.broadcast %6 : vector<8x1xi32> to vector<8x8xi32>
    %9 = vector.broadcast %7 : vector<1x8xi32> to vector<8x8xi32>
    %10 = arith.cmpi eq, %8, %9 : vector<8x8xi32>
    %cst_3 = arith.constant 2.000000e+00 : f32
    %11 = vector.broadcast %cst_3 : f32 to vector<8x8xf32>
    %12 = arith.subf %2, %11 : vector<8x8xf32>
    %13 = arith.select %10, %12, %2 : vector<8x8xi1>, vector<8x8xf32>
    %cst_4 = arith.constant dense<0xFF800000> : vector<8xf32>
    %14 = vector.multi_reduction <maximumf>, %13, %cst_4 [1] : vector<8x8xf32> to vector<8xf32>
    %15 = vector.shape_cast %14 : vector<8xf32> to vector<8x1xf32>
    %c0_5 = arith.constant 0 : index
    %c0_6 = arith.constant 0 : index
    %16 = vector.load %arg3[%c0_5, %c0_6] : memref<8x1xf32, #tpu.memory_space<vmem>>, vector<8x1xf32>
    tpu.vector_store %arg3[%c0_5, %c0_6], %15 {strides = array<i32>} : memref<8x1xf32, #tpu.memory_space<vmem>>, vector<8x1xf32>,
    return
  }
  func.func @transform_0(%arg0: i32) -> (i32, i32) {
    %c0_i32 = arith.constant 0 : i32
    %c0_i32_0 = arith.constant 0 : i32
    return %arg0, %c0_i32 : i32, i32
  }
  func.func @transform_1(%arg0: i32) -> (i32, i32) {
    %c0_i32 = arith.constant 0 : i32
    %c0_i32_0 = arith.constant 0 : i32
    %c0_i32_1 = arith.constant 0 : i32
    return %c0_i32, %c0_i32_0 : i32, i32
  }
  func.func @transform_2(%arg0: i32) -> (i32, i32) {
    %c0_i32 = arith.constant 0 : i32
    %c0_i32_0 = arith.constant 0 : i32
    return %arg0, %c0_i32 : i32, i32
  }
}

</mosaic_0001>

<llo_original>
// kernel: tpu_custom_call.1
$region0: #{tpu_custom_call.1}
  #allocation0 [shape = 'u32[]', space=smem, size = 0x4, offset = 0x4, fixed_abs, tag = 'smem constant byte address 0x4 - core index']
  #allocation1 [shape = 'u32[144,128]{1,0:T(1,128)}', space=vmem, size = 0x12000, scoped, tag = 'internal scratch']
  %s0 = inlined_call_operand.hbm [shape: f32[8,32], index: 0, kind: input, shape index: {}]
  %s1 = inlined_call_operand.hbm [shape: f32[8,32], index: 1, kind: input, shape index: {}]
  %s2 = inlined_call_operand.vmem [shape: f32[8,1], index: 2, kind: output, shape index: {}]
  %s3 = sld [smem:[#allocation0]]
  $region26: #{tpu_custom_call.1} parent=0
    _
  %s5 = ssub.s32 1, %s3
  %s6 = scalar_select 0, %s5, %s3
  $region1: #{tpu_custom_call.1} parent=0
    #allocation2 [shape = 'u8[4096]{0}', space=vmem, size = 0x1000, scoped, tag = 'input window, operand 0, single buffered']
    #allocation3 [shape = 's32[1]{0}', space=sflag, size = 0x4, scoped, tag = 'scoped memory for tpu_custom_call.1']
    #allocation4 [shape = 'u8[4096]{0}', space=vmem, size = 0x1000, scoped, tag = 'input window, operand 1, single buffered']
    #allocation5 [shape = 's32[1]{0}', space=sflag, size = 0x4, scoped, tag = 'scoped memory for tpu_custom_call.1']
    %7 = vsyncpa [#allocation3], 0
    %8 = vsyncpa [#allocation5], 0
    // Predicated region
    $region2: #{tpu_custom_call.1} parent=1 // pred_check
      _
    $region3: #{tpu_custom_call.1} parent=1 // pred_check_branch
      %10 = sbr.rel (0) target = $region5
    $region4: #{tpu_custom_call.1} parent=1 // pred_region
      %s12 = ssub.s32 128, 128
      %13 = vsyncadd [#allocation3], %s12
      %s15 = sshll.u32 [#allocation2], 4
      %s16 = int_to_ptr.vmem [resolvable:$true] %s15
      %18 = dma.hbm_to_vmem [thread:$0]  %s0, 128, %s16, [#allocation3]
    $region5: #{tpu_custom_call.1} parent=1 // pred_fallthru
      _
    // Predicated region
    $region6: #{tpu_custom_call.1} parent=1 // pred_check
      _
    $region7: #{tpu_custom_call.1} parent=1 // pred_check_branch
      %20 = sbr.rel (0) target = $region9
    $region8: #{tpu_custom_call.1} parent=1 // pred_region
      %s22 = ssub.s32 128, 128
      %23 = vsyncadd [#allocation5], %s22
      %s25 = sshll.u32 [#allocation4], 4
      %s26 = int_to_ptr.vmem [resolvable:$true] %s25
      %28 = dma.hbm_to_vmem [thread:$0]  %s1, 128, %s26, [#allocation5]
    $region9: #{tpu_custom_call.1} parent=1 // pred_fallthru
      _
    // Predicated region
    $region10: #{tpu_custom_call.1} parent=1 // pred_check
      _
    $region11: #{tpu_custom_call.1} parent=1 // pred_check_branch
      %30 = sbr.rel (0) target = $region13
    $region12: #{tpu_custom_call.1} parent=1 // pred_region
      %31 = dma.done [#allocation3], 128
    $region13: #{tpu_custom_call.1} parent=1 // pred_fallthru
      _
    // Predicated region
    $region14: #{tpu_custom_call.1} parent=1 // pred_check
      _
    $region15: #{tpu_custom_call.1} parent=1 // pred_check_branch
      %33 = sbr.rel (0) target = $region17
    $region16: #{tpu_custom_call.1} parent=1 // pred_region
      %34 = dma.done [#allocation5], 128
    $region17: #{tpu_custom_call.1} parent=1 // pred_fallthru
      _
    %v35 = vld [vmem:[#allocation2] sm:$0xff]
    %v36 = vld [vmem:[#allocation4] sm:$0xff]
    %vm37 = vcmask 261120
    %v39 = vsel %vm37, %v35, 0
    %v42 = vsel %vm37, %v36, 0
    %44 = vmatprep.subr.mxu0 0.0
    %45 = vmatpush1.xpose.msra.mxu0 %v42
    %46 = vmatprep.subr.mxu0 0.0
    %47 = vmatpush1.xpose.msra.mxu0 0.0
    %48 = vmatprep.subr.mxu0 0.0
    %49 = vmatpush1.xpose.msra.mxu0 0.0
    %50 = vmatprep.subr.mxu0 0.0
    %51 = vmatpush1.xpose.msra.mxu0 0.0
    %52 = vmatprep.subr.mxu0 0.0
    %53 = vmatpush1.xpose.msra.mxu0 0.0
    %54 = vmatprep.subr.mxu0 0.0
    %55 = vmatpush1.xpose.msra.mxu0 0.0
    %56 = vmatprep.subr.mxu0 0.0
    %57 = vmatpush1.xpose.msra.mxu0 0.0
    %58 = vmatprep.subr.mxu0 0.0
    %59 = vmatpush1.xpose.msra.mxu0 0.0
    %60 = vmatprep.subr.mxu0 0.0
    %61 = vmatpush1.xpose.msra.mxu0 0.0
    %62 = vmatprep.subr.mxu0 0.0
    %63 = vmatpush1.xpose.msra.mxu0 0.0
    %64 = vmatprep.subr.mxu0 0.0
    %65 = vmatpush1.xpose.msra.mxu0 0.0
    %66 = vmatprep.subr.mxu0 0.0
    %67 = vmatpush1.xpose.msra.mxu0 0.0
    %68 = vmatprep.subr.mxu0 0.0
    %69 = vmatpush1.xpose.msra.mxu0 0.0
    %70 = vmatprep.subr.mxu0 0.0
    %71 = vmatpush1.xpose.msra.mxu0 0.0
    %72 = vmatprep.subr.mxu0 0.0
    %73 = vmatpush1.xpose.msra.mxu0 0.0
    %74 = vmatprep.subr.mxu0 0.0
    %75 = vmatpush1.xpose.msra.mxu0 0.0
    %76 = vmatprep.subr.mxu0 0.0
    %77 = vmatpush1.xpose.msra.mxu0 0.0
    %78 = vmatprep.subr.mxu0 0.0
    %79 = vmatpush1.xpose.msra.mxu0 0.0
    %80 = vmatprep.subr.mxu0 0.0
    %81 = vmatpush1.xpose.msra.mxu0 0.0
    %82 = vmatprep.subr.mxu0 0.0
    %83 = vmatpush1.xpose.msra.mxu0 0.0
    %84 = vmatprep.subr.mxu0 0.0
    %85 = vmatpush1.xpose.msra.mxu0 0.0
    %86 = vmatprep.subr.mxu0 0.0
    %87 = vmatpush1.xpose.msra.mxu0 0.0
    %88 = vmatprep.subr.mxu0 0.0
    %89 = vmatpush1.xpose.msra.mxu0 0.0
    %90 = vmatprep.subr.mxu0 0.0
    %91 = vmatpush1.xpose.msra.mxu0 0.0
    %92 = vmatprep.subr.mxu0 0.0
    %93 = vmatpush1.xpose.msra.mxu0 0.0
    %94 = vmatprep.subr.mxu0 0.0
    %95 = vmatpush1.xpose.msra.mxu0 0.0
    %96 = vmatprep.subr.mxu0 0.0
    %97 = vmatpush1.xpose.msra.mxu0 0.0
    %98 = vmatprep.subr.mxu0 0.0
    %99 = vmatpush1.xpose.msra.mxu0 0.0
    %100 = vmatprep.subr.mxu0 0.0
    %101 = vmatpush1.xpose.msra.mxu0 0.0
    %102 = vmatprep.subr.mxu0 0.0
    %103 = vmatpush1.xpose.msra.mxu0 0.0
    %104 = vmatprep.subr.mxu0 0.0
    %105 = vmatpush1.xpose.msra.mxu0 0.0
    %106 = vmatprep.subr.mxu0 0.0
    %107 = vmatpush1.xpose.msra.mxu0 0.0
    %108 = vmatprep.mubr.f32.mxu0 0.0
    %109 = vmatmul.mubr.f32.gmra.mrb[0].mxu0 %v39
    %v110 = vpop.f32.mrb[0].mxu0
    %v111 = vadd.f32 0.0, %v110
    %v112 = vpop.f32.mrb[0].mxu0
    %113 = vdwg.mxu0
    %s114 = smul.u32 0, 8
    %v115 = vlaneseq
    %v116 = vshrl.u32 %v115, 7
    %v117 = vstv %s114
    %v118 = vadd.s32 %v117, %v116
    %v119 = vlaneseq
    %v120 = vand.u32 %v119, 127
    %vm121 = vcmp.eq.s32.totalorder %v118, %v120
    %v122 = vsub.f32 %v111, 2.0
    %v123 = vsel %vm121, %v122, %v111
    %vm124 = vcmask 64512
    %v125 = vsel %vm124, %v123, -inf
    %126 = vmax.xlane.f32.xlu0 %v125
    %v127 = vpop.xlane.xlu0 %126
    %vm128 = vcmask 7168
    %129 = vst.msk [vmem:[%s2] sm:$0xff] %vm128, %v127
    // Predicated region
    $region18: #{tpu_custom_call.1} parent=1 // pred_check
      _
    $region19: #{tpu_custom_call.1} parent=1 // pred_check_branch
      %131 = sbr.rel (0) target = $region21
    $region20: #{tpu_custom_call.1} parent=1 // pred_region
      _
    $region21: #{tpu_custom_call.1} parent=1 // pred_fallthru
      _
    // Predicated region
    $region22: #{tpu_custom_call.1} parent=1 // pred_check
      _
    $region23: #{tpu_custom_call.1} parent=1 // pred_check_branch
      %133 = sbr.rel (0) target = $region25
    $region24: #{tpu_custom_call.1} parent=1 // pred_region
      _
    $region25: #{tpu_custom_call.1} parent=1 // pred_fallthru
      _
    %134 = vsyncpa [#allocation3], 1
    %135 = vsyncpa [#allocation5], 1

</llo_original>
